<compile_context>
chip_gen: v7x
topology: tpu7x:2x2x1
jax: 0.10.0
libtpu: 0.0.40
codegen_flags: <defaults>
</compile_context>

<pallas_src>
import jax
import jax.numpy as jnp
import numpy as np
from jax.experimental import pallas as pl
from jax.experimental.pallas import tpu as pltpu


# ----------------------------- Pallas kernel -----------------------------

def _make_kernel(has_skip: bool, P: int, eps: float = 1e-5):
    f32 = jnp.float32
    bf16 = jnp.bfloat16

    def kernel(x_ref, adj_ref, te_ref, w_in_ref, w2_ref, pv_ref, out_ref):
        x = x_ref[...]            # (N, P)  f32, zero-padded channels
        adj = adj_ref[...]        # (N, N)  bf16 normalized adjacency
        te = te_ref[...]          # (1, P)  f32, silu(t_emb @ We + be) precomputed in wrapper
        pv = pv_ref[...]          # (8, P)  f32 packed per-channel params
        g1, be1, b1 = pv[0:1], pv[1:2], pv[2:3]
        g2, be2, b2, bs = pv[3:4], pv[4:5], pv[5:6], pv[6:7]

        def silu(z):
            return z * jax.nn.sigmoid(z)

        def bn_affine(v, g, b):
            # PyTorch BatchNorm1d training-mode forward (biased batch stats over nodes),
            # expressed as a per-channel affine: bn(v) = v * a + c.
            m = jnp.mean(v, axis=0, keepdims=True)
            var = jnp.mean(jnp.square(v - m), axis=0, keepdims=True)
            a = jax.lax.rsqrt(var + eps) * g
            return a, b - m * a

        def mm(a, b):
            # MXU matmul: bf16 operands, f32 accumulation.
            return jnp.dot(a.astype(bf16), b.astype(bf16), preferred_element_type=f32)

        # ---- in_conv (BN -> Dropout(p=0) -> GCNConv -> SiLU), fused with skip GCNConv ----
        a1, c1 = bn_affine(x, g1, be1)
        bn1 = x * a1 + c1                                  # single fused VPU pass, f32
        if has_skip:
            xb = x.astype(bf16)                            # shared bf16 LHS for skip dot
            # bf16 concat (no f32 (N,2P) intermediate); ONE A-hat pass covers both halves.
            xw = jnp.concatenate(
                [mm(bn1, w_in_ref[:, :P]).astype(bf16),    # bn(x) @ W1
                 jnp.dot(xb, w_in_ref[:, P:],
                         preferred_element_type=f32).astype(bf16)],   # x @ Wskip
                axis=1)                                    # (N, 2P) bf16
            agg = jnp.dot(adj, xw, preferred_element_type=f32)        # (N, 2P) f32
            h = silu(agg[:, :P] + b1)
            skip = agg[:, P:] + bs
        else:
            h = silu(mm(adj, mm(bn1, w_in_ref[...])) + b1)
            skip = x

        # ---- emb_layers output (already SiLU'd in wrapper), broadcast-added over nodes ----
        h = h + te

        # ---- out_conv: BN -> Dropout(p=0) -> GCNConv -> SiLU ----
        a2, c2 = bn_affine(h, g2, be2)
        h2 = silu(mm(adj, mm(h * a2 + c2, w2_ref[...])) + b2)

        # ---- residual / skip ----
        out_ref[...] = (skip + h2).astype(out_ref.dtype)

    return kernel


# ----------------------------- wrappers -----------------------------

def _round_up(n, m):
    return ((n + m - 1) // m) * m


def _pad2(a, r, c):
    return jnp.pad(a.astype(jnp.float32), ((0, r - a.shape[0]), (0, c - a.shape[1])))


def _full_spec(shape):
    nd = len(shape)
    return pl.BlockSpec(shape, lambda i, nd=nd: (0,) * nd)


def prepare_graph_resnet_block(params, adj, channels, out_channels, *, has_skip):
    """One-time preparation of the constant kernel operands (padding / packing / bf16 cast)."""
    C, O = channels, out_channels
    if not has_skip:
        assert C == O, "skip_connection=None requires channels == out_channels"
    P = max(_round_up(C, 128), _round_up(O, 128))   # lane-dense channel width
    bf16 = jnp.bfloat16

    w1 = _pad2(params["w1"], P, P)
    w2 = _pad2(params["w2"], P, P)
    if has_skip:
        w_in = jnp.concatenate([w1, _pad2(params["ws"], P, P)], axis=1)   # (P, 2P)
        bs = params["bs"]
    else:
        w_in = w1
        bs = jnp.zeros_like(params["b2"])

    # Pack the 7 per-channel parameter vectors into one (8, P) operand (one DMA, one tile).
    rows = [params["g1"], params["be1"], params["b1"],
            params["g2"], params["be2"], params["b2"], bs,
            jnp.zeros_like(params["b2"])]
    pv = jnp.concatenate([_pad2(r, 1, P) for r in rows], axis=0)

    return {
        "P": P, "C": C, "O": O, "has_skip": has_skip,
        "adj": adj.astype(bf16),          # only N^2-scaling operand: halve its HBM/VMEM bytes
        "w_in": w_in.astype(bf16),
        "w2": w2.astype(bf16),
        "pv": pv,
        "we": params["we"].astype(jnp.float32),
        "be": params["be"].astype(jnp.float32),
    }


def graph_resnet_block(x, t_emb, prep):
    N = x.shape[0]
    P, O, has_skip = prep["P"], prep["O"], prep["has_skip"]

    x_p = _pad2(x, N, P)
    # emb_layers (Linear -> SiLU) hoisted out of the kernel; tiny (1,D)@(D,O) f32 matmul.
    te = t_emb.astype(jnp.float32) @ prep["we"] + prep["be"]
    te = te * jax.nn.sigmoid(te)
    te_p = _pad2(te, 1, P)

    inputs = [x_p, prep["adj"], te_p, prep["w_in"], prep["w2"], prep["pv"]]
    operand_bytes = sum(int(a.size) * a.dtype.itemsize for a in inputs) + N * P * 4
    vmem_limit = int(min(64 * 2**20, max(32 * 2**20, 8 * operand_bytes)))

    out_full = pl.pallas_call(
        _make_kernel(has_skip, P),
        out_shape=jax.ShapeDtypeStruct((N, P), jnp.float32),   # lane-dense (P mult. of 128)
        grid=(1,),
        in_specs=[_full_spec(a.shape) for a in inputs],
        out_specs=_full_spec((N, P)),
        compiler_params=pltpu.CompilerParams(
            dimension_semantics=("arbitrary",),
            vmem_limit_bytes=vmem_limit),
    )(*inputs)
    return out_full[:, :O]


# ----------------------------- JAX glue -----------------------------

def gcn_normalized_adjacency(edge_index, num_nodes):
    """Dense A-hat = D^-1/2 (A + I) D^-1/2 matching PyG GCNConv's gcn_norm (add_self_loops=True).
    Note: duplicate edges collapse to weight 1 (binary adjacency)."""
    src, dst = edge_index[0], edge_index[1]
    A = jnp.zeros((num_nodes, num_nodes), jnp.float32).at[dst, src].set(1.0)
    A = A + jnp.eye(num_nodes, dtype=jnp.float32)
    deg = A.sum(axis=1)
    dinv = 1.0 / jnp.sqrt(deg)
    return A * dinv[:, None] * dinv[None, :]


def init_params(key, channels, out_channels, d_t_emb):
    ks = jax.random.split(key, 8)
    s = 0.1
    return {
        "g1": jnp.ones((1, channels), jnp.float32),
        "be1": jnp.zeros((1, channels), jnp.float32),
        "w1": s * jax.random.normal(ks[0], (channels, out_channels), jnp.float32),
        "b1": s * jax.random.normal(ks[1], (1, out_channels), jnp.float32),
        "we": s * jax.random.normal(ks[2], (d_t_emb, out_channels), jnp.float32),
        "be": s * jax.random.normal(ks[3], (1, out_channels), jnp.float32),
        "g2": jnp.ones((1, out_channels), jnp.float32),
        "be2": jnp.zeros((1, out_channels), jnp.float32),
        "w2": s * jax.random.normal(ks[4], (out_channels, out_channels), jnp.float32),
        "b2": s * jax.random.normal(ks[5], (1, out_channels), jnp.float32),
        "ws": s * jax.random.normal(ks[6], (channels, out_channels), jnp.float32),
        "bs": s * jax.random.normal(ks[7], (1, out_channels), jnp.float32),
    }


def ref_forward(x, adj, t_emb, p, has_skip, eps=1e-5):
    """Pure-JAX f32 reference of the PyTorch forward semantics."""
    def bn(v, g, b):
        m = v.mean(0, keepdims=True)
        var = ((v - m) ** 2).mean(0, keepdims=True)
        return (v - m) / jnp.sqrt(var + eps) * g + b

    def gcn(v, w, b):
        return adj @ (v @ w) + b

    silu = lambda z: z * jax.nn.sigmoid(z)
    h = silu(gcn(bn(x, p["g1"], p["be1"]), p["w1"], p["b1"]))
    h = h + silu(t_emb @ p["we"] + p["be"])
    h2 = silu(gcn(bn(h, p["g2"], p["be2"]), p["w2"], p["b2"]))
    skip = gcn(x, p["ws"], p["bs"]) if has_skip else x
    return skip + h2


# ----------------------------- main -----------------------------

if __name__ == "__main__":
    N = 16             # number of graph nodes
    channels = 8       # input node feature channels
    out_channels = 16  # out_channels != channels -> skip_connection is a GCNConv
    d_t_emb = 32       # time-embedding dim

    key = jax.random.PRNGKey(0)
    kx, kt, kp = jax.random.split(key, 3)

    x = jax.random.normal(kx, (N, channels), jnp.float32)
    t_emb = jax.random.normal(kt, (1, d_t_emb), jnp.float32)

    # bidirectional ring graph, PyG-style edge_index [2, E]
    fwd = np.stack([np.arange(N), (np.arange(N) + 1) % N])
    edge_index = jnp.asarray(np.concatenate([fwd, fwd[::-1]], axis=1), dtype=jnp.int32)

    adj = gcn_normalized_adjacency(edge_index, N)
    params = init_params(kp, channels, out_channels, d_t_emb)

    # Constant operands prepared once (not per forward call).
    prep = prepare_graph_resnet_block(params, adj, channels, out_channels, has_skip=True)

    out = graph_resnet_block(x, t_emb, prep)
    out = jax.block_until_ready(out)

    ref = ref_forward(x, adj, t_emb, params, has_skip=True)
    # Tolerance loosened vs. the pure-f32 reference because MXU operands are bf16
    # (f32 accumulation); error grows slowly with N / node degree.
    np.testing.assert_allclose(np.asarray(out), np.asarray(ref), rtol=3e-2, atol=3e-2)

    print("KERNEL_OK")
</pallas_src>

<mosaic_0001>
module attributes {stable_mosaic.version = 11 : i64} {
  func.func @kernel(%arg0: i32, %arg1: memref<16x128xf32, #tpu.memory_space<vmem>>, %arg2: memref<16x16xbf16, #tpu.memory_space<vmem>>, %arg3: memref<1x128xf32, #tpu.memory_space<vmem>>, %arg4: memref<128x256xbf16, #tpu.memory_space<vmem>>, %arg5: memref<128x128xbf16, #tpu.memory_space<vmem>>, %arg6: memref<8x128xf32, #tpu.memory_space<vmem>>, %arg7: memref<16x128xf32, #tpu.memory_space<vmem>>) attributes {dimension_semantics = [#tpu.dimension_semantics<arbitrary>], iteration_bounds = array<i64: 1>, scalar_prefetch = 0 : i64, scratch_operands = 0 : i64, tpu.core_type = #tpu.core_type<tc>, window_params = [{pipeline_mode = #tpu.pipeline_mode<synchronous>, transform_indices = @transform_0, window_bounds = array<i64: 16, 128>}, {pipeline_mode = #tpu.pipeline_mode<synchronous>, transform_indices = @transform_1, window_bounds = array<i64: 16, 16>}, {pipeline_mode = #tpu.pipeline_mode<synchronous>, transform_indices = @transform_2, window_bounds = array<i64: 1, 128>}, {pipeline_mode = #tpu.pipeline_mode<synchronous>, transform_indices = @transform_3, window_bounds = array<i64: 128, 256>}, {pipeline_mode = #tpu.pipeline_mode<synchronous>, transform_indices = @transform_4, window_bounds = array<i64: 128, 128>}, {pipeline_mode = #tpu.pipeline_mode<synchronous>, transform_indices = @transform_5, window_bounds = array<i64: 8, 128>}, {pipeline_mode = #tpu.pipeline_mode<synchronous>, transform_indices = @transform_6, window_bounds = array<i64: 16, 128>}]} {
    %c0 = arith.constant 0 : index
    %c0_0 = arith.constant 0 : index
    %0 = vector.load %arg1[%c0, %c0_0] : memref<16x128xf32, #tpu.memory_space<vmem>>, vector<16x128xf32>
    %c0_1 = arith.constant 0 : index
    %c0_2 = arith.constant 0 : index
    %1 = vector.load %arg2[%c0_1, %c0_2] : memref<16x16xbf16, #tpu.memory_space<vmem>>, vector<16x16xbf16>
    %c0_3 = arith.constant 0 : index
    %c0_4 = arith.constant 0 : index
    %2 = vector.load %arg3[%c0_3, %c0_4] : memref<1x128xf32, #tpu.memory_space<vmem>>, vector<1x128xf32>
    %c0_5 = arith.constant 0 : index
    %c0_6 = arith.constant 0 : index
    %3 = vector.load %arg6[%c0_5, %c0_6] : memref<8x128xf32, #tpu.memory_space<vmem>>, vector<8x128xf32>
    %4 = vector.extract_strided_slice %3 {offsets = [0, 0], sizes = [1, 128], strides = [1, 1]} : vector<8x128xf32> to vector<1x128xf32>
    %5 = vector.extract_strided_slice %3 {offsets = [1, 0], sizes = [1, 128], strides = [1, 1]} : vector<8x128xf32> to vector<1x128xf32>
    %6 = vector.extract_strided_slice %3 {offsets = [2, 0], sizes = [1, 128], strides = [1, 1]} : vector<8x128xf32> to vector<1x128xf32>
    %7 = vector.extract_strided_slice %3 {offsets = [3, 0], sizes = [1, 128], strides = [1, 1]} : vector<8x128xf32> to vector<1x128xf32>
    %8 = vector.extract_strided_slice %3 {offsets = [4, 0], sizes = [1, 128], strides = [1, 1]} : vector<8x128xf32> to vector<1x128xf32>
    %9 = vector.extract_strided_slice %3 {offsets = [5, 0], sizes = [1, 128], strides = [1, 1]} : vector<8x128xf32> to vector<1x128xf32>
    %10 = vector.extract_strided_slice %3 {offsets = [6, 0], sizes = [1, 128], strides = [1, 1]} : vector<8x128xf32> to vector<1x128xf32>
    %cst = arith.constant dense<0.000000e+00> : vector<128xf32>
    %11 = vector.multi_reduction <add>, %0, %cst [0] : vector<16x128xf32> to vector<128xf32>
    %12 = vector.shape_cast %11 : vector<128xf32> to vector<1x128xf32>
    %cst_7 = arith.constant 1.600000e+01 : f32
    %13 = vector.broadcast %cst_7 : f32 to vector<1x128xf32>
    %14 = arith.divf %12, %13 : vector<1x128xf32>
    %15 = vector.broadcast %14 : vector<1x128xf32> to vector<16x128xf32>
    %16 = arith.subf %0, %15 : vector<16x128xf32>
    %17 = arith.mulf %16, %16 : vector<16x128xf32>
    %cst_8 = arith.constant dense<0.000000e+00> : vector<128xf32>
    %18 = vector.multi_reduction <add>, %17, %cst_8 [0] : vector<16x128xf32> to vector<128xf32>
    %19 = vector.shape_cast %18 : vector<128xf32> to vector<1x128xf32>
    %cst_9 = arith.constant 1.600000e+01 : f32
    %20 = vector.broadcast %cst_9 : f32 to vector<1x128xf32>
    %21 = arith.divf %19, %20 : vector<1x128xf32>
    %cst_10 = arith.constant 9.99999974E-6 : f32
    %22 = vector.broadcast %cst_10 : f32 to vector<1x128xf32>
    %23 = arith.addf %21, %22 : vector<1x128xf32>
    %24 = math.rsqrt %23 : vector<1x128xf32>
    %25 = arith.mulf %24, %4 : vector<1x128xf32>
    %26 = arith.mulf %14, %25 : vector<1x128xf32>
    %27 = arith.subf %5, %26 : vector<1x128xf32>
    %28 = vector.broadcast %25 : vector<1x128xf32> to vector<16x128xf32>
    %29 = arith.mulf %0, %28 : vector<16x128xf32>
    %30 = vector.broadcast %27 : vector<1x128xf32> to vector<16x128xf32>
    %31 = arith.addf %29, %30 : vector<16x128xf32>
    %32 = arith.truncf %0 : vector<16x128xf32> to vector<16x128xbf16>
    %c0_11 = arith.constant 0 : index
    %c0_12 = arith.constant 0 : index
    %33 = vector.load %arg4[%c0_11, %c0_12] : memref<128x256xbf16, #tpu.memory_space<vmem>>, vector<128x128xbf16>
    %34 = arith.truncf %31 : vector<16x128xf32> to vector<16x128xbf16>
    %cst_13 = arith.constant dense<0.000000e+00> : vector<16x128xf32>
    %35 = tpu.matmul %34, %33, %cst_13 {dimension_numbers = #tpu.dot_dimension_numbers<[1], [0], [0], [1], [0, 0, 1, 1], [], []>} : vector<16x128xbf16>, vector<128x128xbf16>, vector<16x128xf32> -> vector<16x128xf32>
    %36 = arith.truncf %35 : vector<16x128xf32> to vector<16x128xbf16>
    %c0_14 = arith.constant 0 : index
    %c128 = arith.constant 128 : index
    %37 = vector.load %arg4[%c0_14, %c128] : memref<128x256xbf16, #tpu.memory_space<vmem>>, vector<128x128xbf16>
    %cst_15 = arith.constant dense<0.000000e+00> : vector<16x128xf32>
    %38 = tpu.matmul %32, %37, %cst_15 {dimension_numbers = #tpu.dot_dimension_numbers<[1], [0], [0], [1], [0, 0, 1, 1], [], []>} : vector<16x128xbf16>, vector<128x128xbf16>, vector<16x128xf32> -> vector<16x128xf32>
    %39 = arith.truncf %38 : vector<16x128xf32> to vector<16x128xbf16>
    %40 = tpu.concatenate %36, %39 in 1 : vector<16x128xbf16>, vector<16x128xbf16> -> vector<16x256xbf16>
    %cst_16 = arith.constant dense<0.000000e+00> : vector<16x256xf32>
    %41 = tpu.matmul %1, %40, %cst_16 {dimension_numbers = #tpu.dot_dimension_numbers<[1], [0], [0], [1], [0, 0, 1, 1], [], []>} : vector<16x16xbf16>, vector<16x256xbf16>, vector<16x256xf32> -> vector<16x256xf32>
    %42 = vector.extract_strided_slice %41 {offsets = [0, 0], sizes = [16, 128], strides = [1, 1]} : vector<16x256xf32> to vector<16x128xf32>
    %43 = vector.broadcast %6 : vector<1x128xf32> to vector<16x128xf32>
    %44 = arith.addf %42, %43 : vector<16x128xf32>
    %45 = arith.negf %44 : vector<16x128xf32>
    %46 = math.exp %45 : vector<16x128xf32>
    %cst_17 = arith.constant 1.000000e+00 : f32
    %47 = vector.broadcast %cst_17 : f32 to vector<16x128xf32>
    %48 = arith.addf %47, %46 : vector<16x128xf32>
    %49 = arith.divf %47, %48 : vector<16x128xf32>
    %50 = arith.mulf %44, %49 : vector<16x128xf32>
    %51 = vector.extract_strided_slice %41 {offsets = [0, 128], sizes = [16, 128], strides = [1, 1]} : vector<16x256xf32> to vector<16x128xf32>
    %52 = vector.broadcast %10 : vector<1x128xf32> to vector<16x128xf32>
    %53 = arith.addf %51, %52 : vector<16x128xf32>
    %54 = vector.broadcast %2 : vector<1x128xf32> to vector<16x128xf32>
    %55 = arith.addf %50, %54 : vector<16x128xf32>
    %cst_18 = arith.constant dense<0.000000e+00> : vector<128xf32>
    %56 = vector.multi_reduction <add>, %55, %cst_18 [0] : vector<16x128xf32> to vector<128xf32>
    %57 = vector.shape_cast %56 : vector<128xf32> to vector<1x128xf32>
    %cst_19 = arith.constant 1.600000e+01 : f32
    %58 = vector.broadcast %cst_19 : f32 to vector<1x128xf32>
    %59 = arith.divf %57, %58 : vector<1x128xf32>
    %60 = vector.broadcast %59 : vector<1x128xf32> to vector<16x128xf32>
    %61 = arith.subf %55, %60 : vector<16x128xf32>
    %62 = arith.mulf %61, %61 : vector<16x128xf32>
    %cst_20 = arith.constant dense<0.000000e+00> : vector<128xf32>
    %63 = vector.multi_reduction <add>, %62, %cst_20 [0] : vector<16x128xf32> to vector<128xf32>
    %64 = vector.shape_cast %63 : vector<128xf32> to vector<1x128xf32>
    %cst_21 = arith.constant 1.600000e+01 : f32
    %65 = vector.broadcast %cst_21 : f32 to vector<1x128xf32>
    %66 = arith.divf %64, %65 : vector<1x128xf32>
    %cst_22 = arith.constant 9.99999974E-6 : f32
    %67 = vector.broadcast %cst_22 : f32 to vector<1x128xf32>
    %68 = arith.addf %66, %67 : vector<1x128xf32>
    %69 = math.rsqrt %68 : vector<1x128xf32>
    %70 = arith.mulf %69, %7 : vector<1x128xf32>
    %71 = arith.mulf %59, %70 : vector<1x128xf32>
    %72 = arith.subf %8, %71 : vector<1x128xf32>
    %73 = vector.broadcast %70 : vector<1x128xf32> to vector<16x128xf32>
    %74 = arith.mulf %55, %73 : vector<16x128xf32>
    %75 = vector.broadcast %72 : vector<1x128xf32> to vector<16x128xf32>
    %76 = arith.addf %74, %75 : vector<16x128xf32>
    %c0_23 = arith.constant 0 : index
    %c0_24 = arith.constant 0 : index
    %77 = vector.load %arg5[%c0_23, %c0_24] : memref<128x128xbf16, #tpu.memory_space<vmem>>, vector<128x128xbf16>
    %78 = arith.truncf %76 : vector<16x128xf32> to vector<16x128xbf16>
    %cst_25 = arith.constant dense<0.000000e+00> : vector<16x128xf32>
    %79 = tpu.matmul %78, %77, %cst_25 {dimension_numbers = #tpu.dot_dimension_numbers<[1], [0], [0], [1], [0, 0, 1, 1], [], []>} : vector<16x128xbf16>, vector<128x128xbf16>, vector<16x128xf32> -> vector<16x128xf32>
    %80 = arith.truncf %79 : vector<16x128xf32> to vector<16x128xbf16>
    %cst_26 = arith.constant dense<0.000000e+00> : vector<16x128xf32>
    %81 = tpu.matmul %1, %80, %cst_26 {dimension_numbers = #tpu.dot_dimension_numbers<[1], [0], [0], [1], [0, 0, 1, 1], [], []>} : vector<16x16xbf16>, vector<16x128xbf16>, vector<16x128xf32> -> vector<16x128xf32>
    %82 = vector.broadcast %9 : vector<1x128xf32> to vector<16x128xf32>
    %83 = arith.addf %81, %82 : vector<16x128xf32>
    %84 = arith.negf %83 : vector<16x128xf32>
    %85 = math.exp %84 : vector<16x128xf32>
    %cst_27 = arith.constant 1.000000e+00 : f32
    %86 = vector.broadcast %cst_27 : f32 to vector<16x128xf32>
    %87 = arith.addf %86, %85 : vector<16x128xf32>
    %88 = arith.divf %86, %87 : vector<16x128xf32>
    %89 = arith.mulf %83, %88 : vector<16x128xf32>
    %90 = arith.addf %53, %89 : vector<16x128xf32>
    %c0_28 = arith.constant 0 : index
    %c0_29 = arith.constant 0 : index
    %91 = vector.load %arg7[%c0_28, %c0_29] : memref<16x128xf32, #tpu.memory_space<vmem>>, vector<16x128xf32>
    tpu.vector_store %arg7[%c0_28, %c0_29], %90 {strides = array<i32>} : memref<16x128xf32, #tpu.memory_space<vmem>>, vector<16x128xf32>,
    return
  }
  func.func @transform_0(%arg0: i32) -> (i32, i32) {
    %c0_i32 = arith.constant 0 : i32
    %c0_i32_0 = arith.constant 0 : i32
    %c0_i32_1 = arith.constant 0 : i32
    return %c0_i32, %c0_i32_0 : i32, i32
  }
  func.func @transform_1(%arg0: i32) -> (i32, i32) {
    %c0_i32 = arith.constant 0 : i32
    %c0_i32_0 = arith.constant 0 : i32
    %c0_i32_1 = arith.constant 0 : i32
    return %c0_i32, %c0_i32_0 : i32, i32
  }
  func.func @transform_2(%arg0: i32) -> (i32, i32) {
    %c0_i32 = arith.constant 0 : i32
    %c0_i32_0 = arith.constant 0 : i32
    %c0_i32_1 = arith.constant 0 : i32
    return %c0_i32, %c0_i32_0 : i32, i32
  }
  func.func @transform_3(%arg0: i32) -> (i32, i32) {
    %c0_i32 = arith.constant 0 : i32
    %c0_i32_0 = arith.constant 0 : i32
    %c0_i32_1 = arith.constant 0 : i32
    return %c0_i32, %c0_i32_0 : i32, i32
  }
  func.func @transform_4(%arg0: i32) -> (i32, i32) {
    %c0_i32 = arith.constant 0 : i32
    %c0_i32_0 = arith.constant 0 : i32
    %c0_i32_1 = arith.constant 0 : i32
    return %c0_i32, %c0_i32_0 : i32, i32
  }
  func.func @transform_5(%arg0: i32) -> (i32, i32) {
    %c0_i32 = arith.constant 0 : i32
    %c0_i32_0 = arith.constant 0 : i32
    %c0_i32_1 = arith.constant 0 : i32
    return %c0_i32, %c0_i32_0 : i32, i32
  }
  func.func @transform_6(%arg0: i32) -> (i32, i32) {
    %c0_i32 = arith.constant 0 : i32
    %c0_i32_0 = arith.constant 0 : i32
    %c0_i32_1 = arith.constant 0 : i32
    return %c0_i32, %c0_i32_0 : i32, i32
  }
}

</mosaic_0001>

<llo_original>
// kernel: tpu_custom_call.1
$region0: #{tpu_custom_call.1}
  #allocation0 [shape = 'u32[]', space=smem, size = 0x4, offset = 0x4, fixed_abs, tag = 'smem constant byte address 0x4 - core index']
  #allocation1 [shape = 'u32[144,128]{1,0:T(1,128)}', space=vmem, size = 0x12000, scoped, tag = 'internal scratch']
  %s0 = inlined_call_operand.hbm [shape: f32[16,128], index: 0, kind: input, shape index: {}]
  %s1 = inlined_call_operand.hbm [shape: bf16[16,16], index: 1, kind: input, shape index: {}]
  %s2 = inlined_call_operand.vmem [shape: f32[1,128], index: 2, kind: input, shape index: {}]
  %s3 = inlined_call_operand.hbm [shape: bf16[128,256], index: 3, kind: input, shape index: {}]
  %s4 = inlined_call_operand.hbm [shape: bf16[128,128], index: 4, kind: input, shape index: {}]
  %s5 = inlined_call_operand.vmem [shape: f32[8,128], index: 5, kind: input, shape index: {}]
  %s6 = inlined_call_operand.hbm [shape: f32[16,128], index: 6, kind: output, shape index: {}]
  %s7 = sld [smem:[#allocation0]]
  $region50: #{tpu_custom_call.1} parent=0
    _
  %s9 = ssub.s32 1, %s7
  %s10 = scalar_select 0, %s9, %s7
  $region1: #{tpu_custom_call.1} parent=0
    #allocation2 [shape = 'u8[8192]{0}', space=vmem, size = 0x2000, scoped, tag = 'input window, operand 0, single buffered']
    #allocation3 [shape = 's32[1]{0}', space=sflag, size = 0x4, scoped, tag = 'scoped memory for tpu_custom_call.1']
    #allocation4 [shape = 's32[1]{0}', space=sflag, size = 0x4, scoped, tag = 'scoped memory for tpu_custom_call.1']
    #allocation5 [shape = 'u8[4096]{0}', space=vmem, size = 0x1000, scoped, tag = 'input window, operand 1, single buffered']
    #allocation6 [shape = 's32[1]{0}', space=sflag, size = 0x4, scoped, tag = 'scoped memory for tpu_custom_call.1']
    #allocation7 [shape = 'u8[65536]{0}', space=vmem, size = 0x10000, scoped, tag = 'input window, operand 3, single buffered']
    #allocation8 [shape = 'u8[32768]{0}', space=vmem, size = 0x8000, scoped, tag = 'input window, operand 4, single buffered']
    #allocation9 [shape = 's32[1]{0}', space=sflag, size = 0x4, scoped, tag = 'scoped memory for tpu_custom_call.1']
    #allocation10 [shape = 'u8[8192]{0}', space=vmem, size = 0x2000, scoped, tag = 'output window, operand 0, single buffered']
    %11 = vsyncpa [#allocation3], 0
    %12 = vsyncpa [#allocation6], 0
    %13 = vsyncpa [#allocation9], 0
    %14 = vsyncpa [#allocation4], 0
    // Predicated region
    $region2: #{tpu_custom_call.1} parent=1 // pred_check
      _
    $region3: #{tpu_custom_call.1} parent=1 // pred_check_branch
      %16 = sbr.rel (0) target = $region5
    $region4: #{tpu_custom_call.1} parent=1 // pred_region
      %s18 = ssub.s32 256, 256
      %19 = vsyncadd [#allocation3], %s18
      %s20 = sshll.u32 [#allocation2], 4
      %s21 = int_to_ptr.vmem [resolvable:$true] %s20
      %26 = dma.hbm_to_vmem [thread:$0]  %s0, 256, %s21, [#allocation3], 128, 128, 8
    $region5: #{tpu_custom_call.1} parent=1 // pred_fallthru
      _
    // Predicated region
    $region6: #{tpu_custom_call.1} parent=1 // pred_check
      _
    $region7: #{tpu_custom_call.1} parent=1 // pred_check_branch
      %28 = sbr.rel (0) target = $region9
    $region8: #{tpu_custom_call.1} parent=1 // pred_region
      %s30 = ssub.s32 128, 128
      %31 = vsyncadd [#allocation6], %s30
      %s32 = sshll.u32 [#allocation5], 4
      %s33 = int_to_ptr.vmem [resolvable:$true] %s32
      %38 = dma.hbm_to_vmem [thread:$0]  %s1, 128, %s33, [#allocation6], 64, 64, 4
    $region9: #{tpu_custom_call.1} parent=1 // pred_fallthru
      _
    // Predicated region
    $region10: #{tpu_custom_call.1} parent=1 // pred_check
      _
    $region11: #{tpu_custom_call.1} parent=1 // pred_check_branch
      %40 = sbr.rel (0) target = $region13
    $region12: #{tpu_custom_call.1} parent=1 // pred_region
      _
    $region13: #{tpu_custom_call.1} parent=1 // pred_fallthru
      _
    // Predicated region
    $region14: #{tpu_custom_call.1} parent=1 // pred_check
      _
    $region15: #{tpu_custom_call.1} parent=1 // pred_check_branch
      %42 = sbr.rel (0) target = $region17
    $region16: #{tpu_custom_call.1} parent=1 // pred_region
      %s44 = ssub.s32 2048, 2048
      %45 = vsyncadd [#allocation6], %s44
      %s46 = sshll.u32 [#allocation7], 4
      %s47 = int_to_ptr.vmem [resolvable:$true] %s46
      %52 = dma.hbm_to_vmem [thread:$0]  %s3, 2048, %s47, [#allocation6], 128, 128, 8
    $region17: #{tpu_custom_call.1} parent=1 // pred_fallthru
      _
    // Predicated region
    $region18: #{tpu_custom_call.1} parent=1 // pred_check
      _
    $region19: #{tpu_custom_call.1} parent=1 // pred_check_branch
      %54 = sbr.rel (0) target = $region21
    $region20: #{tpu_custom_call.1} parent=1 // pred_region
      %s56 = ssub.s32 1024, 1024
      %57 = vsyncadd [#allocation9], %s56
      %s58 = sshll.u32 [#allocation8], 4
      %s59 = int_to_ptr.vmem [resolvable:$true] %s58
      %64 = dma.hbm_to_vmem [thread:$0]  %s4, 1024, %s59, [#allocation9], 64, 64, 4
    $region21: #{tpu_custom_call.1} parent=1 // pred_fallthru
      _
    // Predicated region
    $region22: #{tpu_custom_call.1} parent=1 // pred_check
      _
    $region23: #{tpu_custom_call.1} parent=1 // pred_check_branch
      %66 = sbr.rel (0) target = $region25
    $region24: #{tpu_custom_call.1} parent=1 // pred_region
      _
    $region25: #{tpu_custom_call.1} parent=1 // pred_fallthru
      _
    // Predicated region
    $region26: #{tpu_custom_call.1} parent=1 // pred_check
      _
    $region27: #{tpu_custom_call.1} parent=1 // pred_check_branch
      %68 = sbr.rel (0) target = $region29
    $region28: #{tpu_custom_call.1} parent=1 // pred_region
      %69 = dma.done [#allocation3], 256
    $region29: #{tpu_custom_call.1} parent=1 // pred_fallthru
      _
    // Predicated region
    $region30: #{tpu_custom_call.1} parent=1 // pred_check
      _
    $region31: #{tpu_custom_call.1} parent=1 // pred_check_branch
      %71 = sbr.rel (0) target = $region33
    $region32: #{tpu_custom_call.1} parent=1 // pred_region
      %72 = dma.done [#allocation6], 128
    $region33: #{tpu_custom_call.1} parent=1 // pred_fallthru
      _
    // Predicated region
    $region34: #{tpu_custom_call.1} parent=1 // pred_check
      _
    $region35: #{tpu_custom_call.1} parent=1 // pred_check_branch
      %74 = sbr.rel (0) target = $region37
    $region36: #{tpu_custom_call.1} parent=1 // pred_region
      %75 = dma.done [#allocation6], 2048
    $region37: #{tpu_custom_call.1} parent=1 // pred_fallthru
      _
    // Predicated region
    $region38: #{tpu_custom_call.1} parent=1 // pred_check
      _
    $region39: #{tpu_custom_call.1} parent=1 // pred_check_branch
      %77 = sbr.rel (0) target = $region41
    $region40: #{tpu_custom_call.1} parent=1 // pred_region
      %78 = dma.done [#allocation9], 1024
    $region41: #{tpu_custom_call.1} parent=1 // pred_fallthru
      _
    %v80 = vld [vmem:[#allocation2] sm:$0xff]
    %v81 = vld [vmem:[#allocation2 + $0x8] sm:$0xff]
    %v82 = vld [vmem:[#allocation5] sm:$0xf]
    %v83 = vld [vmem:[#allocation5 + $0x4] sm:$0xf]
    %v84 = vld [vmem:[%s2] sm:$0x1]
    %v85 = vld [vmem:[%s5] sm:$0xff]
    %v86 = vadd.f32 %v80, %v81
    %v87 = vrot.slane %v86, 4
    %v88 = vadd.f32 %v86, %v87
    %v89 = vrot.slane %v88, 2
    %v90 = vadd.f32 %v88, %v89
    %v91 = vrot.slane %v90, 1
    %v92 = vadd.f32 %v90, %v91
    %v93 = vrcp.pop 16.0
    %v94 = vmul.f32 %v92, %v93
    %v95 = vsub.f32 %v80, %v94
    %v96 = vsub.f32 %v81, %v94
    %v97 = vmul.f32 %v95, %v95
    %v98 = vmul.f32 %v96, %v96
    %v99 = vadd.f32 %v97, %v98
    %v100 = vrot.slane %v99, 4
    %v101 = vadd.f32 %v99, %v100
    %v102 = vrot.slane %v101, 2
    %v103 = vadd.f32 %v101, %v102
    %v104 = vrot.slane %v103, 1
    %v105 = vadd.f32 %v103, %v104
    %v106 = vmul.f32 %v105, %v93
    %v107 = vadd.f32 %v106, 1e-05
    %v108 = vrsqrt.pop %v107
    %v109 = vmul.f32 %v108, %v85
    %v110 = vmul.f32 %v94, %v109
    %v112 = vrot.slane %v110, 7
    %v114 = vsub.f32 %v85, %v112
    %v115 = vlaneseq
    %v116 = vshrl.u32 %v115, 7
    %v117 = vsub.s32 0, %v116
    %v118 = vrot.slane %v109, %v117
    %v119 = vmul.f32 %v80, %v118
    %v120 = vmul.f32 %v81, %v118
    %v121 = vlaneseq
    %v122 = vshrl.u32 %v121, 7
    %v123 = vsub.s32 1, %v122
    %v124 = vrot.slane %v114, %v123
    %v125 = vadd.f32 %v119, %v124
    %v126 = vadd.f32 %v120, %v124
    %v127 = vpack.c.bf16 %v81, %v80
    %v128 = vld [vmem:[#allocation7] sm:$0xf]
    %v129 = vld [vmem:[#allocation7 + $0x8] sm:$0xf]
    %v130 = vld [vmem:[#allocation7 + $0x10] sm:$0xf]
    %v131 = vld [vmem:[#allocation7 + $0x18] sm:$0xf]
    %v132 = vld [vmem:[#allocation7 + $0x20] sm:$0xf]
    %v133 = vld [vmem:[#allocation7 + $0x28] sm:$0xf]
    %v134 = vld [vmem:[#allocation7 + $0x30] sm:$0xf]
    %v135 = vld [vmem:[#allocation7 + $0x38] sm:$0xf]
    %v136 = vld [vmem:[#allocation7 + $0x40] sm:$0xf]
    %v137 = vld [vmem:[#allocation7 + $0x48] sm:$0xf]
    %v138 = vld [vmem:[#allocation7 + $0x50] sm:$0xf]
    %v139 = vld [vmem:[#allocation7 + $0x58] sm:$0xf]
    %v140 = vld [vmem:[#allocation7 + $0x60] sm:$0xf]
    %v141 = vld [vmem:[#allocation7 + $0x68] sm:$0xf]
    %v142 = vld [vmem:[#allocation7 + $0x70] sm:$0xf]
    %v143 = vld [vmem:[#allocation7 + $0x78] sm:$0xf]
    %v144 = vpack.c.bf16 %v126, %v125
    %v161 = vunpack.c.l.b16 %v128
    %v162 = vunpack.c.l.b16 %v129
    %v163 = vunpack.c.l.b16 %v130
    %v164 = vunpack.c.l.b16 %v131
    %v165 = vunpack.c.l.b16 %v132
    %v166 = vunpack.c.l.b16 %v133
    %v167 = vunpack.c.l.b16 %v134
    %v168 = vunpack.c.l.b16 %v135
    %v169 = vunpack.c.l.b16 %v136
    %v170 = vunpack.c.l.b16 %v137
    %v171 = vunpack.c.l.b16 %v138
    %v172 = vunpack.c.l.b16 %v139
    %v173 = vunpack.c.l.b16 %v140
    %v174 = vunpack.c.l.b16 %v141
    %v175 = vunpack.c.l.b16 %v142
    %v176 = vunpack.c.l.b16 %v143
    %v177 = vpack.c.b16 %v162, %v161
    %v178 = vpack.c.b16 %v164, %v163
    %v179 = vpack.c.b16 %v166, %v165
    %v180 = vpack.c.b16 %v168, %v167
    %v181 = vpack.c.b16 %v170, %v169
    %v182 = vpack.c.b16 %v172, %v171
    %v183 = vpack.c.b16 %v174, %v173
    %v184 = vpack.c.b16 %v176, %v175
    %193 = vmatprep.subr.bf16.mxu0 0
    %194 = vmatpush1.bf16.msra.mxu0 %v177
    %195 = vmatprep.subr.bf16.mxu0 0
    %196 = vmatpush1.bf16.msra.mxu0 %v178
    %197 = vmatprep.subr.bf16.mxu0 0
    %198 = vmatpush1.bf16.msra.mxu0 %v179
    %199 = vmatprep.subr.bf16.mxu0 0
    %200 = vmatpush1.bf16.msra.mxu0 %v180
    %201 = vmatprep.subr.bf16.mxu0 0
    %202 = vmatpush1.bf16.msra.mxu0 %v181
    %203 = vmatprep.subr.bf16.mxu0 0
    %204 = vmatpush1.bf16.msra.mxu0 %v182
    %205 = vmatprep.subr.bf16.mxu0 0
    %206 = vmatpush1.bf16.msra.mxu0 %v183
    %207 = vmatprep.subr.bf16.mxu0 0
    %208 = vmatpush1.bf16.msra.mxu0 %v184
    %209 = vmatprep.subr.bf16.mxu0 0
    %210 = vmatpush1.bf16.msra.mxu0 0
    %211 = vmatprep.subr.bf16.mxu0 0
    %212 = vmatpush1.bf16.msra.mxu0 0
    %213 = vmatprep.subr.bf16.mxu0 0
    %214 = vmatpush1.bf16.msra.mxu0 0
    %215 = vmatprep.subr.bf16.mxu0 0
    %216 = vmatpush1.bf16.msra.mxu0 0
    %217 = vmatprep.subr.bf16.mxu0 0
    %218 = vmatpush1.bf16.msra.mxu0 0
    %219 = vmatprep.subr.bf16.mxu0 0
    %220 = vmatpush1.bf16.msra.mxu0 0
    %221 = vmatprep.subr.bf16.mxu0 0
    %222 = vmatpush1.bf16.msra.mxu0 0
    %223 = vmatprep.subr.bf16.mxu0 0
    %224 = vmatpush1.bf16.msra.mxu0 0
    %225 = vmatprep.mubr.bf16.mxu0 0
    %226 = vmatmul.mubr.bf16.gmra.mrb[0].mxu0 %v144
    %v227 = vpop.f32.mrb[0].mxu0
    %v228 = vadd.f32 0.0, %v227
    %v229 = vpop.f32.mrb[0].mxu0
    %v230 = vpop.f32.mrb[0].mxu0
    %v231 = vadd.f32 0.0, %v230
    %v232 = vpop.f32.mrb[0].mxu0
    %233 = vdwg.mxu0
    %v234 = vpack.c.bf16 %v231, %v228
    %v235 = vld [vmem:[#allocation7 + $0x4] sm:$0xf]
    %v236 = vld [vmem:[#allocation7 + $0xc] sm:$0xf]
    %v237 = vld [vmem:[#allocation7 + $0x14] sm:$0xf]
    %v238 = vld [vmem:[#allocation7 + $0x1c] sm:$0xf]
    %v239 = vld [vmem:[#allocation7 + $0x24] sm:$0xf]
    %v240 = vld [vmem:[#allocation7 + $0x2c] sm:$0xf]
    %v241 = vld [vmem:[#allocation7 + $0x34] sm:$0xf]
    %v242 = vld [vmem:[#allocation7 + $0x3c] sm:$0xf]
    %v243 = vld [vmem:[#allocation7 + $0x44] sm:$0xf]
    %v244 = vld [vmem:[#allocation7 + $0x4c] sm:$0xf]
    %v245 = vld [vmem:[#allocation7 + $0x54] sm:$0xf]
    %v246 = vld [vmem:[#allocation7 + $0x5c] sm:$0xf]
    %v247 = vld [vmem:[#allocation7 + $0x64] sm:$0xf]
    %v248 = vld [vmem:[#allocation7 + $0x6c] sm:$0xf]
    %v249 = vld [vmem:[#allocation7 + $0x74] sm:$0xf]
    %v250 = vld [vmem:[#allocation7 + $0x7c] sm:$0xf]
    %v267 = vunpack.c.l.b16 %v235
    %v268 = vunpack.c.l.b16 %v236
    %v269 = vunpack.c.l.b16 %v237
    %v270 = vunpack.c.l.b16 %v238
    %v271 = vunpack.c.l.b16 %v239
    %v272 = vunpack.c.l.b16 %v240
    %v273 = vunpack.c.l.b16 %v241
    %v274 = vunpack.c.l.b16 %v242
    %v275 = vunpack.c.l.b16 %v243
    %v276 = vunpack.c.l.b16 %v244
    %v277 = vunpack.c.l.b16 %v245
    %v278 = vunpack.c.l.b16 %v246
    %v279 = vunpack.c.l.b16 %v247
    %v280 = vunpack.c.l.b16 %v248
    %v281 = vunpack.c.l.b16 %v249
    %v282 = vunpack.c.l.b16 %v250
    %v283 = vpack.c.b16 %v268, %v267
    %v284 = vpack.c.b16 %v270, %v269
    %v285 = vpack.c.b16 %v272, %v271
    %v286 = vpack.c.b16 %v274, %v273
    %v287 = vpack.c.b16 %v276, %v275
    %v288 = vpack.c.b16 %v278, %v277
    %v289 = vpack.c.b16 %v280, %v279
    %v290 = vpack.c.b16 %v282, %v281
    %299 = vmatprep.subr.bf16.mxu0 0
    %300 = vmatpush1.bf16.msra.mxu0 %v283
    %301 = vmatprep.subr.bf16.mxu0 0
    %302 = vmatpush1.bf16.msra.mxu0 %v284
    %303 = vmatprep.subr.bf16.mxu0 0
    %304 = vmatpush1.bf16.msra.mxu0 %v285
    %305 = vmatprep.subr.bf16.mxu0 0
    %306 = vmatpush1.bf16.msra.mxu0 %v286
    %307 = vmatprep.subr.bf16.mxu0 0
    %308 = vmatpush1.bf16.msra.mxu0 %v287
    %309 = vmatprep.subr.bf16.mxu0 0
    %310 = vmatpush1.bf16.msra.mxu0 %v288
    %311 = vmatprep.subr.bf16.mxu0 0
    %312 = vmatpush1.bf16.msra.mxu0 %v289
    %313 = vmatprep.subr.bf16.mxu0 0
    %314 = vmatpush1.bf16.msra.mxu0 %v290
    %315 = vmatprep.subr.bf16.mxu0 0
    %316 = vmatpush1.bf16.msra.mxu0 0
    %317 = vmatprep.subr.bf16.mxu0 0
    %318 = vmatpush1.bf16.msra.mxu0 0
    %319 = vmatprep.subr.bf16.mxu0 0
    %320 = vmatpush1.bf16.msra.mxu0 0
    %321 = vmatprep.subr.bf16.mxu0 0
    %322 = vmatpush1.bf16.msra.mxu0 0
    %323 = vmatprep.subr.bf16.mxu0 0
    %324 = vmatpush1.bf16.msra.mxu0 0
    %325 = vmatprep.subr.bf16.mxu0 0
    %326 = vmatpush1.bf16.msra.mxu0 0
    %327 = vmatprep.subr.bf16.mxu0 0
    %328 = vmatpush1.bf16.msra.mxu0 0
    %329 = vmatprep.subr.bf16.mxu0 0
    %330 = vmatpush1.bf16.msra.mxu0 0
    %331 = vmatprep.mubr.bf16.mxu0 0
    %332 = vmatmul.mubr.bf16.gmra.mrb[0].mxu0 %v127
    %v333 = vpop.f32.mrb[0].mxu0
    %v334 = vadd.f32 0.0, %v333
    %v335 = vpop.f32.mrb[0].mxu0
    %v336 = vpop.f32.mrb[0].mxu0
    %v337 = vadd.f32 0.0, %v336
    %v338 = vpop.f32.mrb[0].mxu0
    %339 = vdwg.mxu0
    %v340 = vpack.c.bf16 %v337, %v334
    %v343 = vunpack.c.l.b16 %v82
    %v344 = vunpack.c.l.b16 %v83
    %v345 = vpack.c.b16 %v344, %v343
    %vm346 = vcmask 130048
    %v348 = vsel %vm346, %v345, 0
    %350 = vmatprep.subr.bf16.mxu0 %v340
    %351 = vmatpush1.bf16.msra.mxu0 %v234
    %352 = vmatprep.subr.bf16.mxu0 0
    %353 = vmatpush1.bf16.msra.mxu0 0
    %354 = vmatprep.subr.bf16.mxu0 0
    %355 = vmatpush1.bf16.msra.mxu0 0
    %356 = vmatprep.subr.bf16.mxu0 0
    %357 = vmatpush1.bf16.msra.mxu0 0
    %358 = vmatprep.subr.bf16.mxu0 0
    %359 = vmatpush1.bf16.msra.mxu0 0
    %360 = vmatprep.subr.bf16.mxu0 0
    %361 = vmatpush1.bf16.msra.mxu0 0
    %362 = vmatprep.subr.bf16.mxu0 0
    %363 = vmatpush1.bf16.msra.mxu0 0
    %364 = vmatprep.subr.bf16.mxu0 0
    %365 = vmatpush1.bf16.msra.mxu0 0
    %366 = vmatprep.subr.bf16.mxu0 0
    %367 = vmatpush1.bf16.msra.mxu0 0
    %368 = vmatprep.subr.bf16.mxu0 0
    %369 = vmatpush1.bf16.msra.mxu0 0
    %370 = vmatprep.subr.bf16.mxu0 0
    %371 = vmatpush1.bf16.msra.mxu0 0
    %372 = vmatprep.subr.bf16.mxu0 0
    %373 = vmatpush1.bf16.msra.mxu0 0
    %374 = vmatprep.subr.bf16.mxu0 0
    %375 = vmatpush1.bf16.msra.mxu0 0
    %376 = vmatprep.subr.bf16.mxu0 0
    %377 = vmatpush1.bf16.msra.mxu0 0
    %378 = vmatprep.subr.bf16.mxu0 0
    %379 = vmatpush1.bf16.msra.mxu0 0
    %380 = vmatprep.subr.bf16.mxu0 0
    %381 = vmatpush1.bf16.msra.mxu0 0
    %382 = vmatprep.mubr.bf16.mxu0 0
    %383 = vmatmul.mubr.bf16.gmra.mrb[0].mxu0 %v348
    %v384 = vpop.f32.mrb[0].mxu0
    %v385 = vadd.f32 0.0, %v384
    %v386 = vpop.f32.mrb[0].mxu0
    %v387 = vadd.f32 0.0, %v386
    %v388 = vpop.f32.mrb[0].mxu0
    %v389 = vadd.f32 0.0, %v388
    %v390 = vpop.f32.mrb[0].mxu0
    %v391 = vadd.f32 0.0, %v390
    %392 = vdwg.mxu0
    %v393 = vlaneseq
    %v394 = vshrl.u32 %v393, 7
    %v395 = vsub.s32 2, %v394
    %v396 = vrot.slane %v85, %v395
    %v397 = vadd.f32 %v385, %v396
    %v398 = vadd.f32 %v389, %v396
    %v399 = vxor.u32 %v397, 2147483648
    %v400 = vxor.u32 %v398, 2147483648
    %v401 = vmul.f32 %v399, 1.442695
    %v402 = vpow.pop %v401
    %v403 = vmul.f32 %v400, 1.442695
    %v404 = vpow.pop %v403
    %v405 = vadd.f32 %v402, 1.0
    %v406 = vadd.f32 %v404, 1.0
    %v407 = vrcp.pop %v405
    %v408 = vmul.f32 1.0, %v407
    %v409 = vrcp.pop %v406
    %v410 = vmul.f32 1.0, %v409
    %v411 = vmul.f32 %v397, %v408
    %v412 = vmul.f32 %v398, %v410
    %v413 = vlaneseq
    %v414 = vshrl.u32 %v413, 7
    %v415 = vsub.s32 6, %v414
    %v416 = vrot.slane %v85, %v415
    %v417 = vadd.f32 %v387, %v416
    %v418 = vadd.f32 %v391, %v416
    %v420 = vlaneseq
    %v421 = vshrl.u32 %v420, 7
    %v422 = vsub.s32 0, %v421
    %v423 = vrot.slane %v84, %v422
    %v425 = vadd.f32 %v411, %v423
    %v426 = vadd.f32 %v412, %v423
    %v427 = vadd.f32 %v425, %v426
    %v428 = vrot.slane %v427, 4
    %v429 = vadd.f32 %v427, %v428
    %v430 = vrot.slane %v429, 2
    %v431 = vadd.f32 %v429, %v430
    %v432 = vrot.slane %v431, 1
    %v433 = vadd.f32 %v431, %v432
    %v434 = vmul.f32 %v433, %v93
    %v435 = vsub.f32 %v425, %v434
    %v436 = vsub.f32 %v426, %v434
    %v437 = vmul.f32 %v435, %v435
    %v438 = vmul.f32 %v436, %v436
    %v439 = vadd.f32 %v437, %v438
    %v440 = vrot.slane %v439, 4
    %v441 = vadd.f32 %v439, %v440
    %v442 = vrot.slane %v441, 2
    %v443 = vadd.f32 %v441, %v442
    %v444 = vrot.slane %v443, 1
    %v445 = vadd.f32 %v443, %v444
    %v446 = vmul.f32 %v445, %v93
    %v447 = vadd.f32 %v446, 1e-05
    %v448 = vrsqrt.pop %v447
    %v449 = vmul.f32 %v448, %v85
    %v450 = vmul.f32 %v434, %v449
    %v452 = vrot.slane %v450, 7
    %v454 = vsub.f32 %v85, %v452
    %v455 = vlaneseq
    %v456 = vshrl.u32 %v455, 7
    %v457 = vsub.s32 3, %v456
    %v458 = vrot.slane %v449, %v457
    %v459 = vmul.f32 %v425, %v458
    %v460 = vmul.f32 %v426, %v458
    %v461 = vlaneseq
    %v462 = vshrl.u32 %v461, 7
    %v463 = vsub.s32 4, %v462
    %v464 = vrot.slane %v454, %v463
    %v465 = vadd.f32 %v459, %v464
    %v466 = vadd.f32 %v460, %v464
    %v467 = vld [vmem:[#allocation8] sm:$0xf]
    %v468 = vld [vmem:[#allocation8 + $0x4] sm:$0xf]
    %v469 = vld [vmem:[#allocation8 + $0x8] sm:$0xf]
    %v470 = vld [vmem:[#allocation8 + $0xc] sm:$0xf]
    %v471 = vld [vmem:[#allocation8 + $0x10] sm:$0xf]
    %v472 = vld [vmem:[#allocation8 + $0x14] sm:$0xf]
    %v473 = vld [vmem:[#allocation8 + $0x18] sm:$0xf]
    %v474 = vld [vmem:[#allocation8 + $0x1c] sm:$0xf]
    %v475 = vld [vmem:[#allocation8 + $0x20] sm:$0xf]
    %v476 = vld [vmem:[#allocation8 + $0x24] sm:$0xf]
    %v477 = vld [vmem:[#allocation8 + $0x28] sm:$0xf]
    %v478 = vld [vmem:[#allocation8 + $0x2c] sm:$0xf]
    %v479 = vld [vmem:[#allocation8 + $0x30] sm:$0xf]
    %v480 = vld [vmem:[#allocation8 + $0x34] sm:$0xf]
    %v481 = vld [vmem:[#allocation8 + $0x38] sm:$0xf]
    %v482 = vld [vmem:[#allocation8 + $0x3c] sm:$0xf]
    %v483 = vpack.c.bf16 %v466, %v465
    %v500 = vunpack.c.l.b16 %v467
    %v501 = vunpack.c.l.b16 %v468
    %v502 = vunpack.c.l.b16 %v469
    %v503 = vunpack.c.l.b16 %v470
    %v504 = vunpack.c.l.b16 %v471
    %v505 = vunpack.c.l.b16 %v472
    %v506 = vunpack.c.l.b16 %v473
    %v507 = vunpack.c.l.b16 %v474
    %v508 = vunpack.c.l.b16 %v475
    %v509 = vunpack.c.l.b16 %v476
    %v510 = vunpack.c.l.b16 %v477
    %v511 = vunpack.c.l.b16 %v478
    %v512 = vunpack.c.l.b16 %v479
    %v513 = vunpack.c.l.b16 %v480
    %v514 = vunpack.c.l.b16 %v481
    %v515 = vunpack.c.l.b16 %v482
    %v516 = vpack.c.b16 %v501, %v500
    %v517 = vpack.c.b16 %v503, %v502
    %v518 = vpack.c.b16 %v505, %v504
    %v519 = vpack.c.b16 %v507, %v506
    %v520 = vpack.c.b16 %v509, %v508
    %v521 = vpack.c.b16 %v511, %v510
    %v522 = vpack.c.b16 %v513, %v512
    %v523 = vpack.c.b16 %v515, %v514
    %532 = vmatprep.subr.bf16.mxu0 0
    %533 = vmatpush1.bf16.msra.mxu0 %v516
    %534 = vmatprep.subr.bf16.mxu0 0
    %535 = vmatpush1.bf16.msra.mxu0 %v517
    %536 = vmatprep.subr.bf16.mxu0 0
    %537 = vmatpush1.bf16.msra.mxu0 %v518
    %538 = vmatprep.subr.bf16.mxu0 0
    %539 = vmatpush1.bf16.msra.mxu0 %v519
    %540 = vmatprep.subr.bf16.mxu0 0
    %541 = vmatpush1.bf16.msra.mxu0 %v520
    %542 = vmatprep.subr.bf16.mxu0 0
    %543 = vmatpush1.bf16.msra.mxu0 %v521
    %544 = vmatprep.subr.bf16.mxu0 0
    %545 = vmatpush1.bf16.msra.mxu0 %v522
    %546 = vmatprep.subr.bf16.mxu0 0
    %547 = vmatpush1.bf16.msra.mxu0 %v523
    %548 = vmatprep.subr.bf16.mxu0 0
    %549 = vmatpush1.bf16.msra.mxu0 0
    %550 = vmatprep.subr.bf16.mxu0 0
    %551 = vmatpush1.bf16.msra.mxu0 0
    %552 = vmatprep.subr.bf16.mxu0 0
    %553 = vmatpush1.bf16.msra.mxu0 0
    %554 = vmatprep.subr.bf16.mxu0 0
    %555 = vmatpush1.bf16.msra.mxu0 0
    %556 = vmatprep.subr.bf16.mxu0 0
    %557 = vmatpush1.bf16.msra.mxu0 0
    %558 = vmatprep.subr.bf16.mxu0 0
    %559 = vmatpush1.bf16.msra.mxu0 0
    %560 = vmatprep.subr.bf16.mxu0 0
    %561 = vmatpush1.bf16.msra.mxu0 0
    %562 = vmatprep.subr.bf16.mxu0 0
    %563 = vmatpush1.bf16.msra.mxu0 0
    %564 = vmatprep.mubr.bf16.mxu0 0
    %565 = vmatmul.mubr.bf16.gmra.mrb[0].mxu0 %v483
    %v566 = vpop.f32.mrb[0].mxu0
    %v567 = vadd.f32 0.0, %v566
    %v568 = vpop.f32.mrb[0].mxu0
    %v569 = vpop.f32.mrb[0].mxu0
    %v570 = vadd.f32 0.0, %v569
    %v571 = vpop.f32.mrb[0].mxu0
    %572 = vdwg.mxu0
    %v573 = vpack.c.bf16 %v570, %v567
    %v574 = vlaneseq
    %v575 = vshrl.u32 %v574, 7
    %v576 = vsub.s32 5, %v575
    %v577 = vrot.slane %v85, %v576
    %578 = vmatprep.subr.bf16.mxu0 0
    %579 = vmatpush1.bf16.msra.mxu0 %v573
    %580 = vmatprep.subr.bf16.mxu0 0
    %581 = vmatpush1.bf16.msra.mxu0 0
    %582 = vmatprep.subr.bf16.mxu0 0
    %583 = vmatpush1.bf16.msra.mxu0 0
    %584 = vmatprep.subr.bf16.mxu0 0
    %585 = vmatpush1.bf16.msra.mxu0 0
    %586 = vmatprep.subr.bf16.mxu0 0
    %587 = vmatpush1.bf16.msra.mxu0 0
    %588 = vmatprep.subr.bf16.mxu0 0
    %589 = vmatpush1.bf16.msra.mxu0 0
    %590 = vmatprep.subr.bf16.mxu0 0
    %591 = vmatpush1.bf16.msra.mxu0 0
    %592 = vmatprep.subr.bf16.mxu0 0
    %593 = vmatpush1.bf16.msra.mxu0 0
    %594 = vmatprep.subr.bf16.mxu0 0
    %595 = vmatpush1.bf16.msra.mxu0 0
    %596 = vmatprep.subr.bf16.mxu0 0
    %597 = vmatpush1.bf16.msra.mxu0 0
    %598 = vmatprep.subr.bf16.mxu0 0
    %599 = vmatpush1.bf16.msra.mxu0 0
    %600 = vmatprep.subr.bf16.mxu0 0
    %601 = vmatpush1.bf16.msra.mxu0 0
    %602 = vmatprep.subr.bf16.mxu0 0
    %603 = vmatpush1.bf16.msra.mxu0 0
    %604 = vmatprep.subr.bf16.mxu0 0
    %605 = vmatpush1.bf16.msra.mxu0 0
    %606 = vmatprep.subr.bf16.mxu0 0
    %607 = vmatpush1.bf16.msra.mxu0 0
    %608 = vmatprep.subr.bf16.mxu0 0
    %609 = vmatpush1.bf16.msra.mxu0 0
    %610 = vmatprep.mubr.bf16.mxu0 0
    %611 = vmatmul.mubr.bf16.gmra.mrb[0].mxu0 %v348
    %v612 = vpop.f32.mrb[0].mxu0
    %v613 = vadd.f32 %v577, %v612
    %v614 = vpop.f32.mrb[0].mxu0
    %v615 = vpop.f32.mrb[0].mxu0
    %v616 = vadd.f32 %v577, %v615
    %v617 = vpop.f32.mrb[0].mxu0
    %618 = vdwg.mxu0
    %v619 = vxor.u32 %v613, 2147483648
    %v620 = vxor.u32 %v616, 2147483648
    %v621 = vmul.f32 %v619, 1.442695
    %v622 = vpow.pop %v621
    %v623 = vmul.f32 %v620, 1.442695
    %v624 = vpow.pop %v623
    %v625 = vadd.f32 %v622, 1.0
    %v626 = vadd.f32 %v624, 1.0
    %v627 = vrcp.pop %v625
    %v628 = vmul.f32 1.0, %v627
    %v629 = vrcp.pop %v626
    %v630 = vmul.f32 1.0, %v629
    %v631 = vmul.f32 %v613, %v628
    %v632 = vmul.f32 %v616, %v630
    %v633 = vadd.f32 %v417, %v631
    %v634 = vadd.f32 %v418, %v632
    %635 = vst [vmem:[#allocation10] sm:$0xff] %v633
    %636 = vst [vmem:[#allocation10 + $0x8] sm:$0xff] %v634
    // Predicated region
    $region42: #{tpu_custom_call.1} parent=1 // pred_check
      _
    $region43: #{tpu_custom_call.1} parent=1 // pred_check_branch
      %638 = sbr.rel (0) target = $region45
    $region44: #{tpu_custom_call.1} parent=1 // pred_region
      %s640 = ssub.s32 256, 256
      %641 = vsyncadd [#allocation4], %s640
      %s642 = sshll.u32 [#allocation10], 4
      %s643 = int_to_ptr.vmem [resolvable:$true] %s642
      %648 = dma.vmem_to_hbm [thread:$0]  %s643, 256, %s6, [#allocation4], 128, 128, 8
    $region45: #{tpu_custom_call.1} parent=1 // pred_fallthru
      _
    // Predicated region
    $region46: #{tpu_custom_call.1} parent=1 // pred_check
      _
    $region47: #{tpu_custom_call.1} parent=1 // pred_check_branch
      %650 = sbr.rel (0) target = $region49
    $region48: #{tpu_custom_call.1} parent=1 // pred_region
      %651 = dma.done [#allocation4], 256
    $region49: #{tpu_custom_call.1} parent=1 // pred_fallthru
      _
    %652 = vsyncpa [#allocation3], 1
    %653 = vsyncpa [#allocation6], 1
    %654 = vsyncpa [#allocation9], 1
    %655 = vsyncpa [#allocation4], 1

</llo_original>
